<compile_context>
chip_gen: v6e
topology: v6e:2x2x1
jax: 0.10.0
libtpu: 0.0.40
codegen_flags: <defaults>
</compile_context>

<pallas_src>
import jax
import jax.numpy as jnp
from jax.experimental import pallas as pl
from jax.experimental.pallas import tpu as pltpu

_LANE = 128
_SUBLANE = 8


def _round_down(value, multiple):
    return (value // multiple) * multiple


def _row_block_sum(x_ref, row_off, n_rows, lanes):
    """f32 lane-chunked sum of x_ref[row_off:row_off+n_rows, :lanes].

    Returns (partial, tail_col):
      partial  : (n_rows, 128) f32 lane-wise partial sums over all full
                 128-lane chunks, or None if lanes < 128.
      tail_col : (n_rows, 1) f32 sum of the trailing lanes (lanes % 128),
                 or None if lanes is a multiple of 128.
    Input is cast to f32 per chunk; only a few vregs are live at any point.
    """
    n_full, rem = divmod(lanes, _LANE)
    rows_sl = pl.ds(row_off, n_rows)

    def load(lane_off, width=_LANE):
        return x_ref[rows_sl, pl.ds(lane_off, width)].astype(jnp.float32)

    partial = None
    if n_full == 1:
        partial = load(0)
    elif n_full > 1:
        n_pairs, odd = divmod(n_full, 2)
        zero = jnp.zeros((n_rows, _LANE), jnp.float32)
        if n_pairs <= 8:
            a0, a1 = zero, zero
            for p in range(n_pairs):
                a0 = a0 + load(2 * p * _LANE)
                a1 = a1 + load((2 * p + 1) * _LANE)
        else:
            def body(p, carry):
                a0, a1 = carry
                off = pl.multiple_of(p * (2 * _LANE), _LANE)
                a0 = a0 + x_ref[rows_sl, pl.ds(off, _LANE)].astype(jnp.float32)
                a1 = a1 + x_ref[rows_sl, pl.ds(off + _LANE, _LANE)].astype(jnp.float32)
                return a0, a1

            a0, a1 = jax.lax.fori_loop(0, n_pairs, body, (zero, zero), unroll=2)
        if odd:
            a0 = a0 + load(n_pairs * 2 * _LANE)
        partial = a0 + a1

    tail_col = None
    if rem > 0:
        tail = load(n_full * _LANE, rem)                   # (n_rows, rem) static slice
        tail_col = jnp.sum(tail, axis=-1, keepdims=True)   # (n_rows, 1)

    return partial, tail_col


def _make_single_kernel(hw_lanes, row_tile, row_group, inv_hw):
    """Kernel for the common case: the whole hw extent fits in one block."""
    n_groups = row_tile // row_group          # exact by construction

    def handle_group(x_ref, o_ref, row_off):
        partial, tail_col = _row_block_sum(x_ref, row_off, row_group, hw_lanes)
        if partial is not None:
            total = jnp.sum(partial, axis=-1, keepdims=True)
            if tail_col is not None:
                total = total + tail_col
        else:
            total = tail_col
        o_ref[pl.ds(row_off, row_group), :] = (total * inv_hw).astype(o_ref.dtype)

    def kernel(x_ref, o_ref):
        if n_groups == 1:
            handle_group(x_ref, o_ref, 0)
        else:
            @pl.loop(0, n_groups)
            def _(g):
                handle_group(x_ref, o_ref, pl.multiple_of(g * row_group, row_group))

    return kernel


def _make_multi_kernel(hw, hw_tile, row_tile, inv_hw):
    """Fallback for very large hw: tile the reduction axis (last grid axis)."""
    num_hw_blocks = pl.cdiv(hw, hw_tile)
    rem_lanes = hw - (num_hw_blocks - 1) * hw_tile    # valid lanes in last block

    def kernel(x_ref, o_ref, acc_ref):
        k = pl.program_id(1)
        last = pl.num_programs(1) - 1

        @pl.when(k < last)
        def _body():
            partial, _unused = _row_block_sum(x_ref, 0, row_tile, hw_tile)

            @pl.when(k == 0)
            def _init():
                acc_ref[...] = partial

            @pl.when(k > 0)
            def _accum():
                acc_ref[...] += partial

        @pl.when(k == last)
        def _finalize():
            # Last block: only rem_lanes are valid (static) -> partial slices,
            # no mask work; combine with the carried accumulator and store.
            partial, tail_col = _row_block_sum(x_ref, 0, row_tile, rem_lanes)
            acc = acc_ref[...]
            if partial is not None:
                acc = acc + partial
            total = jnp.sum(acc, axis=-1, keepdims=True)
            if tail_col is not None:
                total = total + tail_col
            o_ref[...] = (total * inv_hw).astype(o_ref.dtype)

    return kernel


def global_pooling_head(features, *, block_bytes=8 * 1024 * 1024):
    """AdaptiveAvgPool2d((1, 1)) + view(N, 1, C) for NCHW `features`."""
    N, C, H, W = features.shape
    hw = H * W
    rows = N * C
    inv_hw = 1.0 / float(hw)
    itemsize = features.dtype.itemsize

    # Fold part of hw into the row axis when N*C is tiny so that the grid has
    # >= 2 row blocks (keeps both v7x TensorCores busy); the fold sub-rows are
    # summed in a tiny JAX epilogue below.
    fold = 1
    if rows < 2 * _SUBLANE:
        for g in (2, 4, 8, 16):
            if hw % g == 0 and rows * g >= 2 * _SUBLANE:
                fold = g
                break
    rows_k = rows * fold
    hw_k = hw // fold

    x = features.reshape(rows_k, hw_k)      # glue reshape, no extra HBM traffic

    # ---- tile selection -----------------------------------------------------
    min_rows = min(rows_k, _SUBLANE)
    if rows_k >= _SUBLANE:
        # Cap the row tile so there are >= 2 row blocks whenever rows_k >= 16.
        row_cap = max(_SUBLANE, _round_down(rows_k // 2, _SUBLANE))
    else:
        row_cap = rows_k

    single_hw_block = min_rows * hw_k * itemsize <= block_bytes

    if single_hw_block:
        # Common case: full-extent lane dimension, contiguous DMA per block,
        # no mask, 1-D grid over rows only.
        hw_tile = hw_k
        row_budget = max(min_rows,
                         _round_down(block_bytes // (hw_k * itemsize), _SUBLANE))
        row_tile = min(row_cap, row_budget, 8192)
        if row_tile >= 32:
            row_tile = _round_down(row_tile, 32)
        elif row_tile >= _SUBLANE:
            row_tile = _round_down(row_tile, _SUBLANE)
        if row_tile % 32 == 0:
            row_group = 32
        elif row_tile % 16 == 0:
            row_group = 16
        elif row_tile % _SUBLANE == 0:
            row_group = _SUBLANE
        else:
            row_group = row_tile            # rows_k < 8: full-extent row block

        grid = (pl.cdiv(rows_k, row_tile),)
        kernel = _make_single_kernel(hw_tile, row_tile, row_group, inv_hw)
        in_specs = [pl.BlockSpec((row_tile, hw_tile), lambda r: (r, 0))]
        out_specs = pl.BlockSpec((row_tile, 1), lambda r: (r, 0))
        scratch_shapes = []
        dim_sem = ("parallel",)
    else:
        # Very large hw: tile the reduction axis (last, 'arbitrary') and carry
        # a small f32 lane accumulator across the hw blocks.
        row_tile = min_rows
        hw_tile = max(_LANE,
                      _round_down(block_bytes // (row_tile * itemsize), _LANE))
        grid = (pl.cdiv(rows_k, row_tile), pl.cdiv(hw_k, hw_tile))
        kernel = _make_multi_kernel(hw_k, hw_tile, row_tile, inv_hw)
        in_specs = [pl.BlockSpec((row_tile, hw_tile), lambda r, k: (r, k))]
        out_specs = pl.BlockSpec((row_tile, 1), lambda r, k: (r, 0))
        scratch_shapes = [pltpu.VMEM((row_tile, _LANE), jnp.float32)]
        dim_sem = ("parallel", "arbitrary")

    in_bytes = rows_k * hw_k * itemsize
    out_bytes = rows_k * itemsize
    cost = pl.CostEstimate(flops=rows_k * hw_k, transcendentals=0,
                           bytes_accessed=in_bytes + out_bytes)

    # Double-buffered input blocks + working set; explicit so v5e's 16 MiB
    # scoped default does not constrain the pipeline and v7x's 64 MiB physical
    # VMEM is not exceeded.
    vmem_limit = min(48 * 1024 * 1024, max(32 * 1024 * 1024, 3 * block_bytes))

    out = pl.pallas_call(
        kernel,
        out_shape=jax.ShapeDtypeStruct((rows_k, 1), features.dtype),
        grid_spec=pltpu.PrefetchScalarGridSpec(
            num_scalar_prefetch=0,
            grid=grid,
            in_specs=in_specs,
            out_specs=out_specs,
            scratch_shapes=scratch_shapes,
        ),
        compiler_params=pltpu.CompilerParams(
            dimension_semantics=dim_sem,
            vmem_limit_bytes=vmem_limit,
        ),
        cost_estimate=cost,
    )(x)

    if fold > 1:
        # Each kernel row holds (sub-row sum) / hw; summing the fold sub-rows
        # reconstructs the full mean. Tiny epilogue, done in f32.
        out = out.reshape(rows, fold).astype(jnp.float32).sum(axis=-1)
        out = out.astype(features.dtype)
    return out.reshape(N, 1, C)


if __name__ == "__main__":
    key = jax.random.PRNGKey(0)

    # Primary check (spec shape): N=2, C=4, H=W=16.
    N, C, H, W = 2, 4, 16, 16
    features = jax.random.normal(key, (N, C, H, W), dtype=jnp.float32)
    out = jax.block_until_ready(global_pooling_head(features))
    ref = jnp.mean(features, axis=(2, 3)).reshape(N, 1, C)
    assert out.shape == (N, 1, C), out.shape
    assert jnp.allclose(out, ref, atol=1e-5, rtol=1e-5), "mismatch vs reference"

    # Secondary check: exercises the partial trailing-lane path (hw=196).
    key2 = jax.random.PRNGKey(1)
    N2, C2, H2, W2 = 2, 32, 14, 14
    features2 = jax.random.normal(key2, (N2, C2, H2, W2), dtype=jnp.float32)
    out2 = jax.block_until_ready(global_pooling_head(features2))
    ref2 = jnp.mean(features2, axis=(2, 3)).reshape(N2, 1, C2)
    assert out2.shape == (N2, 1, C2), out2.shape
    assert jnp.allclose(out2, ref2, atol=1e-5, rtol=1e-5), "mismatch vs reference (2)"

    print("KERNEL_OK")
</pallas_src>

<mosaic_0001>
module attributes {stable_mosaic.version = 11 : i64} {
  func.func @kernel(%arg0: i32, %arg1: memref<8x128xf32, #tpu.memory_space<vmem>>, %arg2: memref<8x1xf32, #tpu.memory_space<vmem>>) attributes {dimension_semantics = [#tpu.dimension_semantics<parallel>], iteration_bounds = array<i64: 2>, scalar_prefetch = 0 : i64, scratch_operands = 0 : i64, tpu.core_type = #tpu.core_type<tc>, window_params = [{transform_indices = @transform_0, window_bounds = array<i64: 8, 128>}, {transform_indices = @transform_1, window_bounds = array<i64: 8, 1>}]} {
    %c0 = arith.constant 0 : index
    %c0_0 = arith.constant 0 : index
    %0 = vector.load %arg1[%c0, %c0_0] : memref<8x128xf32, #tpu.memory_space<vmem>>, vector<8x128xf32>
    %cst = arith.constant dense<0.000000e+00> : vector<8xf32>
    %1 = vector.multi_reduction <add>, %0, %cst [1] : vector<8x128xf32> to vector<8xf32>
    %2 = vector.shape_cast %1 : vector<8xf32> to vector<8x1xf32>
    %cst_1 = arith.constant 3.906250e-03 : f32
    %3 = vector.broadcast %cst_1 : f32 to vector<8x1xf32>
    %4 = arith.mulf %2, %3 : vector<8x1xf32>
    %c0_2 = arith.constant 0 : index
    %c0_3 = arith.constant 0 : index
    %5 = vector.load %arg2[%c0_2, %c0_3] : memref<8x1xf32, #tpu.memory_space<vmem>>, vector<8x1xf32>
    tpu.vector_store %arg2[%c0_2, %c0_3], %4 {strides = array<i32>} : memref<8x1xf32, #tpu.memory_space<vmem>>, vector<8x1xf32>,
    return
  }
  func.func @transform_0(%arg0: i32) -> (i32, i32) {
    %c0_i32 = arith.constant 0 : i32
    %c0_i32_0 = arith.constant 0 : i32
    return %arg0, %c0_i32 : i32, i32
  }
  func.func @transform_1(%arg0: i32) -> (i32, i32) {
    %c0_i32 = arith.constant 0 : i32
    %c0_i32_0 = arith.constant 0 : i32
    return %arg0, %c0_i32 : i32, i32
  }
}

</mosaic_0001>

<llo_original>
// kernel: tpu_custom_call.1
$region0: #{tpu_custom_call.1}
  #allocation0 [shape = 'u32[]', space=smem, size = 0x4, offset = 0x4, fixed_abs, tag = 'smem constant byte address 0x4 - core index']
  #allocation1 [shape = 'u32[144,128]{1,0:T(1,128)}', space=vmem, size = 0x12000, scoped, tag = 'internal scratch']
  %s0 = inlined_call_operand.hbm [shape: f32[16,128], index: 0, kind: input, shape index: {}]
  %s1 = inlined_call_operand.vmem [shape: f32[16,1], index: 1, kind: output, shape index: {}]
  %s2 = sld [smem:[#allocation0]]
  $region41: #{tpu_custom_call.1} parent=0
    _
  %s4 = ssub.s32 1, %s2
  %s5 = scalar_select 0, %s4, %s2
  $region1: #{tpu_custom_call.1} parent=0
    #allocation2 [shape = 'u8[8192]{0}', space=vmem, size = 0x2000, scoped, tag = 'input window, operand 0']
    #allocation3 [shape = 's32[2]{0}', space=sflag, size = 0x8, scoped, tag = 'scoped memory for tpu_custom_call.1']
    %6 = vsyncpa [#allocation3], 0
    %s7 = scalar_lea.sflag [#allocation3], 1
    %8 = vsyncpa %s7, 0
    loop: start=0, step=1, limit=4
    $region2: #{tpu_custom_call.1} parent=1 // loop_pre_header
      _
    $region3: #{tpu_custom_call.1} parent=1 // loop_header
      %s10 = sphi 0, %s14
      %p11 = scmp.ge.s32.totalorder %s10, 4
      %s20 = sphi 0, %s22
      %s23 = sphi 0, %s20
      %s24 = sphi 0, %s23
      %s40 = sphi 0, %s24
      %s46 = sphi 0, %s48
      %s49 = sphi 0, %s46
      %s50 = sphi 0, %s49
      %s66 = sphi 0, %s50
    $region4: #{tpu_custom_call.1} parent=1 // loop_header_branch
      %13 = sbr.rel (%p11) target = $region8
    $region5: #{tpu_custom_call.1} parent=1 // loop_body
      %s15 = ssub.s32 %s10, 1
      %s16 = ssub.s32 %s10, 2
      %s17 = sadd.s32 %s10, 1
      %s18 = ssub.s32 %s10, %s17
      %p19 = scmp.eq.s32.totalorder %s18, 0
      %s21 = sadd.s32 %s20, 1
      %s22 = scalar_select %p19, %s20, %s21
      %p25 = pneg %p19
      %p26 = scmp.eq.s32.totalorder %s10, 1
      %p27 = por %p25, %p26
      %p28 = scmp.ne.s32.totalorder %s20, %s23
      %p29 = scmp.eq.s32.totalorder %s10, 0
      %p30 = por %p28, %p29
      %p31 = scmp.ne.s32.totalorder %s20, %s23
      %p32 = scmp.eq.s32.totalorder %s15, 1
      %p33 = por %p31, %p32
      %p34 = scmp.ne.s32.totalorder %s23, %s24
      %p35 = scmp.eq.s32.totalorder %s15, 0
      %p36 = por %p34, %p35
      %p37 = scmp.ne.s32.totalorder %s23, %s24
      %p38 = scmp.eq.s32.totalorder %s16, 1
      %p39 = por %p37, %p38
      %p41 = scmp.ne.s32.totalorder %s24, %s40
      %p42 = scmp.eq.s32.totalorder %s16, 0
      %p43 = por %p41, %p42
      %s44 = ssub.s32 %s10, %s17
      %p45 = scmp.eq.s32.totalorder %s44, 0
      %s47 = sadd.s32 %s46, 1
      %s48 = scalar_select %p45, %s46, %s47
      %p51 = pneg %p45
      %p52 = scmp.eq.s32.totalorder %s10, 1
      %p53 = por %p51, %p52
      %p54 = scmp.ne.s32.totalorder %s46, %s49
      %p55 = scmp.eq.s32.totalorder %s10, 0
      %p56 = por %p54, %p55
      %p57 = scmp.ne.s32.totalorder %s46, %s49
      %p58 = scmp.eq.s32.totalorder %s15, 1
      %p59 = por %p57, %p58
      %p60 = scmp.ne.s32.totalorder %s49, %s50
      %p61 = scmp.eq.s32.totalorder %s15, 0
      %p62 = por %p60, %p61
      %p63 = scmp.ne.s32.totalorder %s49, %s50
      %p64 = scmp.eq.s32.totalorder %s16, 1
      %p65 = por %p63, %p64
      %p67 = scmp.ne.s32.totalorder %s50, %s66
      %p68 = scmp.eq.s32.totalorder %s16, 0
      %p69 = por %p67, %p68
      %p70 = scmp.le.s32.totalorder 1, %s10
      %p71 = scmp.lt.s32.totalorder %s10, 3
      %p72 = pnand %p70, %p71
      %p73 = pneg %p72
      // Predicated region
      $region9: #{tpu_custom_call.1} parent=5 // pred_check
        _
      $region10: #{tpu_custom_call.1} parent=5 // pred_check_branch
        %75 = sbr.rel (%p72) target = $region12
      $region11: #{tpu_custom_call.1} parent=5 // pred_region
        %s76 = ssub.s32 %s10, 1
      $region12: #{tpu_custom_call.1} parent=5 // pred_fallthru
        _
      %p77 = scmp.lt.s32.totalorder %s10, 2
      // Predicated region
      $region13: #{tpu_custom_call.1} parent=5 // pred_check
        %p78 = pneg %p77
      $region14: #{tpu_custom_call.1} parent=5 // pred_check_branch
        %80 = sbr.rel (%p78) target = $region16
      $region15: #{tpu_custom_call.1} parent=5 // pred_region
        // Predicated region
        $region17: #{tpu_custom_call.1} parent=15 // pred_check
          %p81 = pneg %p30
        $region18: #{tpu_custom_call.1} parent=15 // pred_check_branch
          %83 = sbr.rel (%p81) target = $region20
        $region19: #{tpu_custom_call.1} parent=15 // pred_region
          %s84 = sand.u32 %s20, 1
          %s85 = scalar_lea.sflag [#allocation3], %s84
          %s86 = sand.u32 %s20, 1
          %s87 = smul.addr %s86, 8
          %s88 = scalar_lea.vmem [#allocation2], %s87
          %s90 = ssub.s32 128, 128
          %91 = vsyncadd %s85, %s90
          %s92 = smul.addr %s10, 128
          %s93 = scalar_lea.hbm %s0, %s92
          %s95 = sshll.u32 %s88, 4
          %s96 = int_to_ptr.vmem [resolvable:$true] %s95
          %98 = dma.hbm_to_vmem [thread:$0]  %s93, 128, %s96, %s85
        $region20: #{tpu_custom_call.1} parent=15 // pred_fallthru
          _
      $region16: #{tpu_custom_call.1} parent=5 // pred_fallthru
        _
      %p99 = scmp.le.s32.totalorder 1, %s10
      %p100 = scmp.lt.s32.totalorder %s10, 3
      %p101 = pnand %p99, %p100
      %p102 = pneg %p101
      // Predicated region
      $region21: #{tpu_custom_call.1} parent=5 // pred_check
        _
      $region22: #{tpu_custom_call.1} parent=5 // pred_check_branch
        %104 = sbr.rel (%p101) target = $region24
      $region23: #{tpu_custom_call.1} parent=5 // pred_region
        %s105 = ssub.s32 %s10, 1
        %s106 = sand.u32 %s23, 1
        %s107 = scalar_lea.sflag [#allocation3], %s106
        %s108 = sand.u32 %s23, 1
        %s109 = smul.addr %s108, 8
        %s110 = scalar_lea.vmem [#allocation2], %s109
        // Predicated region
        $region25: #{tpu_custom_call.1} parent=23 // pred_check
          %p111 = pneg %p36
        $region26: #{tpu_custom_call.1} parent=23 // pred_check_branch
          %113 = sbr.rel (%p111) target = $region28
        $region27: #{tpu_custom_call.1} parent=23 // pred_region
          %114 = dma.done %s107, 128
        $region28: #{tpu_custom_call.1} parent=23 // pred_fallthru
          _
        %s115 = sand.u32 %s23, 1
        %s116 = scalar_lea.sflag [#allocation3], %s115
        %s117 = sand.u32 %s23, 1
        %s118 = smul.addr %s117, 8
        %s119 = scalar_lea.vmem [#allocation2], %s118
        %p120 = pneg %p36
        %p121 = pneg %p33
        %p122 = pneg %p62
        %p123 = pneg %p59
        %p124 = scmp.lt.s32.totalorder %s15, 1
        %s125 = scalar_select %p124, %s15, 1
        %s126 = smul.addr %s125, 8
        %s127 = scalar_lea.vmem %s1, %s126
        %p128 = scmp.lt.s32.totalorder %s15, 1
        %s129 = scalar_select %p128, %s15, 1
        %s130 = smul.addr %s129, 8
        %s131 = scalar_lea.vmem %s1, %s130
        %v132 = vld [vmem:[%s110] sm:$0xff]
        %133 = vadd.xlane.f32.xlu0 %v132
        %v134 = vpop.xlane.xlu0 %133
        %v135 = vmul.f32 %v134, 0.00390625
        %vm136 = vcmask 7168
        %137 = vst.msk [vmem:[%s131] sm:$0xff] %vm136, %v135
        %p138 = scmp.lt.s32.totalorder %s15, 1
        %s139 = scalar_select %p138, %s15, 1
        %s140 = smul.addr %s139, 8
        %s141 = scalar_lea.vmem %s1, %s140
        // Predicated region
        $region29: #{tpu_custom_call.1} parent=23 // pred_check
          %p142 = pneg %p59
        $region30: #{tpu_custom_call.1} parent=23 // pred_check_branch
          %144 = sbr.rel (%p142) target = $region32
        $region31: #{tpu_custom_call.1} parent=23 // pred_region
          _
        $region32: #{tpu_custom_call.1} parent=23 // pred_fallthru
          _
      $region24: #{tpu_custom_call.1} parent=5 // pred_fallthru
        _
      %p145 = scmp.le.s32.totalorder 2, %s10
      // Predicated region
      $region33: #{tpu_custom_call.1} parent=5 // pred_check
        %p146 = pneg %p145
      $region34: #{tpu_custom_call.1} parent=5 // pred_check_branch
        %148 = sbr.rel (%p146) target = $region36
      $region35: #{tpu_custom_call.1} parent=5 // pred_region
        %s149 = ssub.s32 %s10, 2
        // Predicated region
        $region37: #{tpu_custom_call.1} parent=35 // pred_check
          %p150 = pneg %p65
        $region38: #{tpu_custom_call.1} parent=35 // pred_check_branch
          %152 = sbr.rel (%p150) target = $region40
        $region39: #{tpu_custom_call.1} parent=35 // pred_region
          %p153 = scmp.lt.s32.totalorder %s16, 1
          %s154 = scalar_select %p153, %s16, 1
          %s155 = smul.addr %s154, 8
          %s156 = scalar_lea.vmem %s1, %s155
        $region40: #{tpu_custom_call.1} parent=35 // pred_fallthru
          _
      $region36: #{tpu_custom_call.1} parent=5 // pred_fallthru
        _
    $region6: #{tpu_custom_call.1} parent=1 // loop_footer
      %s14 = sadd.s32 1, %s10
    $region7: #{tpu_custom_call.1} parent=1 // loop_footer_branch
      %9 = sbr.rel target = $region3
    $region8: #{tpu_custom_call.1} parent=1 // loop_exit
      _
    %157 = vsyncpa [#allocation3], 1
    %s158 = scalar_lea.sflag [#allocation3], 1
    %159 = vsyncpa %s158, 1

</llo_original>
